<compile_context>
chip_gen: v7x
topology: tpu7x:2x2x1
jax: 0.10.0
libtpu: 0.0.40
codegen_flags: <defaults>
</compile_context>

<pallas_src>
import functools
import math

import jax
import jax.numpy as jnp
from jax.experimental import pallas as pl
from jax.experimental.pallas import tpu as pltpu


def _round_up(x: int, m: int) -> int:
    return ((x + m - 1) // m) * m


# ---------------------------------------------------------------------------
# Kernel 1 (heavy, HBM-bound streaming):
#   grid = (ns, lt):  ns = L-splits ("parallel", megacore on v7x),
#                     lt = L-tiles per split ("arbitrary" sequential reduction).
#   partials[s] = sum over this split's L tiles of relu(reps @ W_main + token_pll * w_pll)
# ---------------------------------------------------------------------------
def _sum_relu_linear_kernel(reps_ref, tpll_ref, w_main_ref, w_pll_ref,
                            part_ref, acc_ref, *, use_token_pll: bool):
    l = pl.program_id(1)

    @pl.when(l == 0)
    def _init():
        acc_ref[...] = jnp.zeros_like(acc_ref)

    B, tl, E = reps_ref.shape
    D = acc_ref.shape[-1]

    # MXU: batch folded into M -> one (B*tl, E) x (E, D) matmul per step, f32 accumulation.
    reps = reps_ref[...].reshape(B * tl, E)
    h = jnp.dot(reps, w_main_ref[...], preferred_element_type=jnp.float32)      # (B*tl, D)

    if use_token_pll:
        # token_pll column as a rank-1 VPU term (kept f32 on the VPU) instead of
        # materializing concat([token_reps, token_pll], -1) in HBM.
        pll = tpll_ref[...].reshape(B * tl, 1).astype(jnp.float32)
        h = h + pll * w_pll_ref[...]                                             # (B*tl,1)*(1,D)

    # ReLU + within-tile reduction EVERY step (cross-sublane sum rides the idle XLU);
    # the running accumulator is only (B, D) f32.
    acc_ref[...] += jnp.sum(jnp.maximum(h, 0.0).reshape(B, tl, D), axis=1)

    @pl.when(l == pl.num_programs(1) - 1)
    def _flush():
        part_ref[...] = acc_ref[...]


# ---------------------------------------------------------------------------
# Kernel 2 (tiny epilogue, runs once on [ns, B, D] / [B, C] data):
#   sum split partials + concat(total_pll) + BatchNorm1d (training-mode batch stats).
#   BatchNorm is per-feature, so the total_pll column normalizes independently.
# ---------------------------------------------------------------------------
def _concat_bn_kernel(part_ref, total_pll_ref, gm_ref, bm_ref, gp_ref, bp_ref,
                      out_ref, *, use_total_pll: bool, bn_eps: float, out_dim: int):
    summed = jnp.sum(part_ref[...], axis=0)                                      # (B, D) f32
    mean = jnp.mean(summed, axis=0, keepdims=True)
    var = jnp.mean((summed - mean) ** 2, axis=0, keepdims=True)
    y = (summed - mean) * jax.lax.rsqrt(var + bn_eps) * gm_ref[...] + bm_ref[...]
    if use_total_pll:
        out_ref[:, :out_dim] = y.astype(out_ref.dtype)
        t = total_pll_ref[...].astype(jnp.float32)                               # (B, 1)
        tm = jnp.mean(t, axis=0, keepdims=True)
        tv = jnp.mean((t - tm) ** 2, axis=0, keepdims=True)
        ty = (t - tm) * jax.lax.rsqrt(tv + bn_eps) * gp_ref[...] + bp_ref[...]
        out_ref[:, out_dim:] = ty.astype(out_ref.dtype)
    else:
        out_ref[...] = y.astype(out_ref.dtype)


# ---------------------------------------------------------------------------
# Wrapper
# ---------------------------------------------------------------------------
def learnable_averager_forward(token_reps, token_pll, total_pll, w, gamma, beta, *,
                               use_token_pll=True, use_total_pll=True,
                               tl=None, num_splits=2, reps_buffers=2,
                               compute_dtype=jnp.float32, bn_eps=1e-5,
                               vmem_budget_bytes=None):
    """token_reps [B,L,E], token_pll [B,L,1], total_pll [B,1], w [F,D] (F=E+use_token_pll),
    gamma/beta [D+use_total_pll] -> [B, D+use_total_pll].

    Pass compute_dtype=jnp.bfloat16 for production ESM shapes: activations are cast in the
    wrapper (halving streamed HBM traffic) and the MXU runs bf16 with f32 accumulation.
    """
    B, L, E = token_reps.shape
    F, D = w.shape
    assert F == E + int(use_token_pll), "weight in_features mismatch"
    C = D + int(use_total_pll)
    assert gamma.shape == (C,) and beta.shape == (C,)

    act_bytes = jnp.dtype(compute_dtype).itemsize

    # Weights: main block for the MXU (compute dtype); token_pll row stays f32 (VPU-side add).
    w_main = w[:E, :].astype(compute_dtype)                                      # (E, D)
    w_pll = (w[E:, :] if use_token_pll else jnp.zeros((1, D), w.dtype)).astype(jnp.float32)

    # Activations: cast ONCE in the wrapper so the streamed HBM bytes shrink with the dtype.
    token_reps = token_reps.astype(compute_dtype)
    if token_pll is None:
        token_pll = jnp.zeros((B, L, 1), compute_dtype)
    token_pll = token_pll.astype(compute_dtype)
    if total_pll is None:
        total_pll = jnp.zeros((B, 1), jnp.float32)

    # --- VMEM budget / L-tile sizing (per generation, not a flat heuristic) ---------------
    if vmem_budget_bytes is None:
        try:
            cap = pltpu.get_tpu_info().vmem_capacity_bytes
        except Exception:
            cap = 64 * 1024 * 1024            # v7x physical VMEM; safe on every generation
        vmem_budget_bytes = cap * 3 // 4      # headroom for Mosaic internal scratch
    vmem_budget_bytes = int(vmem_budget_bytes)

    nbuf = max(2, int(reps_buffers))
    # Resident bytes: weights + (B, D) accumulator + double-buffered (B, D) partial output + slop.
    resident = E * D * act_bytes + D * 4 + 3 * B * D * 4 + (1 << 20)
    # Streamed bytes per sequence row: reps row (E lanes) + token_pll row (lane-padded to 128).
    per_row = B * (E + (128 if use_token_pll else 0)) * act_bytes
    tl_cap = (vmem_budget_bytes - resident) // (nbuf * per_row)
    tl_cap = (tl_cap // 8) * 8
    if tl is None:
        assert tl_cap >= 8, "VMEM budget too small for an 8-row tile at this B/E/dtype"
        tl = int(min(tl_cap, _round_up(L, 8), 4096))
    assert tl > 0 and tl % 8 == 0, "tl must be a positive multiple of 8"

    # Pad L to a multiple of tl; zero rows are inert (no bias, relu(0) == 0).
    Lp = _round_up(L, tl)
    if Lp != L:
        token_reps = jnp.pad(token_reps, ((0, 0), (0, Lp - L), (0, 0)))
        token_pll = jnp.pad(token_pll, ((0, 0), (0, Lp - L), (0, 0)))

    n_tiles = Lp // tl
    ns = math.gcd(max(1, int(num_splits)), n_tiles)   # L-splits: "parallel" axis (v7x megacore)
    lt = n_tiles // ns

    reps_kwargs = {} if nbuf == 2 else {"pipeline_mode": pl.Buffered(nbuf)}
    reps_spec = pl.BlockSpec((B, tl, E), lambda s, l: (0, s * lt + l, 0), **reps_kwargs)

    kernel = functools.partial(_sum_relu_linear_kernel, use_token_pll=use_token_pll)
    partials = pl.pallas_call(
        kernel,
        out_shape=jax.ShapeDtypeStruct((ns, B, D), jnp.float32),
        grid_spec=pltpu.PrefetchScalarGridSpec(
            num_scalar_prefetch=0,
            grid=(ns, lt),
            in_specs=[
                reps_spec,                                                # streamed activations
                pl.BlockSpec((B, tl, 1), lambda s, l: (0, s * lt + l, 0)),  # streamed token_pll
                pl.BlockSpec(memory_space=pltpu.MemorySpace.VMEM),        # w_main (resident)
                pl.BlockSpec(memory_space=pltpu.MemorySpace.VMEM),        # w_pll  (resident)
            ],
            out_specs=pl.BlockSpec((None, B, D), lambda s, l: (s, 0, 0)),
            scratch_shapes=[pltpu.VMEM((B, D), jnp.float32)],
        ),
        compiler_params=pltpu.CompilerParams(
            dimension_semantics=("parallel", "arbitrary"),
            vmem_limit_bytes=vmem_budget_bytes,
        ),
    )(token_reps, token_pll, w_main, w_pll)

    # Tiny epilogue kernel: sum split partials + concat(total_pll) + BatchNorm1d.
    gamma = gamma.astype(jnp.float32)
    beta = beta.astype(jnp.float32)
    gm, bm = gamma[:D].reshape(1, D), beta[:D].reshape(1, D)
    if use_total_pll:
        gp, bp = gamma[D:].reshape(1, 1), beta[D:].reshape(1, 1)
    else:
        gp, bp = jnp.ones((1, 1), jnp.float32), jnp.zeros((1, 1), jnp.float32)

    bn_kernel = functools.partial(_concat_bn_kernel, use_total_pll=use_total_pll,
                                  bn_eps=bn_eps, out_dim=D)
    return pl.pallas_call(
        bn_kernel,
        out_shape=jax.ShapeDtypeStruct((B, C), jnp.float32),
        in_specs=[pl.BlockSpec(memory_space=pltpu.MemorySpace.VMEM)] * 6,
        out_specs=pl.BlockSpec(memory_space=pltpu.MemorySpace.VMEM),
    )(partials, total_pll.astype(jnp.float32), gm, bm, gp, bp)


if __name__ == "__main__":
    # Small shapes consistent with the module's forward.
    B, L, E = 4, 32, 32         # batch, seq length, encoder embed_dim
    D = 32                      # averager_output_dim
    use_token_pll = True
    use_total_pll = True
    F = E + int(use_token_pll)  # linear in_features
    C = D + int(use_total_pll)  # embed_dim fed to BatchNorm1d

    key = jax.random.PRNGKey(0)
    k1, k2, k3, k4, k5, k6 = jax.random.split(key, 6)

    def q(x):  # make values exactly bf16-representable so f32 and bf16 paths agree tightly
        return x.astype(jnp.bfloat16).astype(jnp.float32)

    # Synthetic encoder outputs (the ESM encoder itself is not translated).
    token_reps = q(jax.random.normal(k1, (B, L, E), dtype=jnp.float32))
    token_pll = q(jax.random.normal(k2, (B, L, 1), dtype=jnp.float32))
    total_pll = q(jax.random.normal(k3, (B, 1), dtype=jnp.float32))

    # nn.Linear(in=F, out=D, bias=False): weight [D, F]; stored transposed as [F, D].
    w = q(jax.random.normal(k4, (F, D), dtype=jnp.float32) * (1.0 / jnp.sqrt(F)))
    gamma = q(1.0 + 0.1 * jax.random.normal(k5, (C,), dtype=jnp.float32))
    beta = q(0.1 * jax.random.normal(k6, (C,), dtype=jnp.float32))

    # Pure-JAX reference mirroring the PyTorch module's forward.
    rep_ref = jnp.concatenate([token_reps, token_pll], axis=-1)                  # [B, L, F]
    h_ref = jnp.einsum("blf,fd->bld", rep_ref, w, preferred_element_type=jnp.float32)
    summed = jnp.sum(jax.nn.relu(h_ref), axis=1)                                 # [B, D]
    pre_bn = jnp.concatenate([summed, total_pll], axis=-1)                       # [B, C]
    mean = jnp.mean(pre_bn, axis=0, keepdims=True)
    var = jnp.mean((pre_bn - mean) ** 2, axis=0, keepdims=True)
    ref = (pre_bn - mean) * jax.lax.rsqrt(var + 1e-5) * gamma + beta

    # 1) f32, auto-derived tl (single L tile, single split).
    out_a = jax.block_until_ready(learnable_averager_forward(
        token_reps, token_pll, total_pll, w, gamma, beta,
        use_token_pll=use_token_pll, use_total_pll=use_total_pll,
        compute_dtype=jnp.float32))
    assert out_a.shape == (B, C)
    assert jnp.allclose(out_a, ref, atol=1e-3, rtol=1e-3), "f32 (auto tl) mismatch vs reference"

    # 2) f32, explicit tl=8 + num_splits=2 -> exercises multi-tile accumulation and the
    #    parallel L-split + partial-sum combine.
    out_b = jax.block_until_ready(learnable_averager_forward(
        token_reps, token_pll, total_pll, w, gamma, beta,
        use_token_pll=use_token_pll, use_total_pll=use_total_pll,
        tl=8, num_splits=2, compute_dtype=jnp.float32))
    assert jnp.allclose(out_b, ref, atol=1e-3, rtol=1e-3), "f32 (split) mismatch vs reference"

    # 3) bf16 MXU path (production setting): activations cast in the wrapper.
    out_c = jax.block_until_ready(learnable_averager_forward(
        token_reps, token_pll, total_pll, w, gamma, beta,
        use_token_pll=use_token_pll, use_total_pll=use_total_pll,
        tl=8, num_splits=2, compute_dtype=jnp.bfloat16))
    assert jnp.allclose(out_c, ref, atol=2e-3, rtol=2e-3), "bf16 path mismatch vs reference"

    print("KERNEL_OK")
</pallas_src>

<mosaic_0001>
module attributes {stable_mosaic.version = 11 : i64} {
  func.func @_sum_relu_linear_kernel(%arg0: i32, %arg1: i32, %arg2: memref<4x32x32xf32, #tpu.memory_space<vmem>>, %arg3: memref<4x32x1xf32, #tpu.memory_space<vmem>>, %arg4: memref<32x32xf32, #tpu.memory_space<vmem>>, %arg5: memref<1x32xf32, #tpu.memory_space<vmem>>, %arg6: memref<1x4x32xf32, #tpu.memory_space<vmem>>, %arg7: memref<4x32xf32, #tpu.memory_space<vmem>>) attributes {dimension_semantics = [#tpu.dimension_semantics<parallel>, #tpu.dimension_semantics<arbitrary>], iteration_bounds = array<i64: 1, 1>, scalar_prefetch = 0 : i64, scratch_operands = 1 : i64, tpu.core_type = #tpu.core_type<tc>, window_params = [{transform_indices = @transform_0, window_bounds = array<i64: 4, 32, 32>}, {transform_indices = @transform_1, window_bounds = array<i64: 4, 32, 1>}, {pipeline_mode = #tpu.pipeline_mode<synchronous>, transform_indices = @transform_2, window_bounds = array<i64: 32, 32>}, {pipeline_mode = #tpu.pipeline_mode<synchronous>, transform_indices = @transform_3, window_bounds = array<i64: 1, 32>}, {transform_indices = @transform_4, window_bounds = array<i64: 1, 4, 32>}]} {
    %c0_i32 = arith.constant 0 : i32
    %0 = arith.cmpi eq, %arg1, %c0_i32 : i32
    %1 = arith.extui %0 : i1 to i32
    %c0_i32_0 = arith.constant 0 : i32
    %2 = arith.cmpi ne, %1, %c0_i32_0 : i32
    scf.if %2 {
      %cst_18 = arith.constant 0.000000e+00 : f32
      %24 = vector.broadcast %cst_18 : f32 to vector<4x32xf32>
      %c0_19 = arith.constant 0 : index
      %c0_20 = arith.constant 0 : index
      %25 = vector.load %arg7[%c0_19, %c0_20] : memref<4x32xf32, #tpu.memory_space<vmem>>, vector<4x32xf32>
      tpu.vector_store %arg7[%c0_19, %c0_20], %24 {strides = array<i32>} : memref<4x32xf32, #tpu.memory_space<vmem>>, vector<4x32xf32>,
    } else {
    }
    %c0 = arith.constant 0 : index
    %c0_1 = arith.constant 0 : index
    %c0_2 = arith.constant 0 : index
    %3 = vector.load %arg2[%c0, %c0_1, %c0_2] : memref<4x32x32xf32, #tpu.memory_space<vmem>>, vector<4x32x32xf32>
    %4 = vector.shape_cast %3 : vector<4x32x32xf32> to vector<128x32xf32>
    %c0_3 = arith.constant 0 : index
    %c0_4 = arith.constant 0 : index
    %5 = vector.load %arg4[%c0_3, %c0_4] : memref<32x32xf32, #tpu.memory_space<vmem>>, vector<32x32xf32>
    %cst = arith.constant dense<0.000000e+00> : vector<128x32xf32>
    %6 = tpu.matmul %4, %5, %cst {dimension_numbers = #tpu.dot_dimension_numbers<[1], [0], [0], [1], [0, 0, 1, 1], [], []>} : vector<128x32xf32>, vector<32x32xf32>, vector<128x32xf32> -> vector<128x32xf32>
    %c0_5 = arith.constant 0 : index
    %c0_6 = arith.constant 0 : index
    %c0_7 = arith.constant 0 : index
    %7 = vector.load %arg3[%c0_5, %c0_6, %c0_7] : memref<4x32x1xf32, #tpu.memory_space<vmem>>, vector<4x32x1xf32>
    %8 = vector.shape_cast %7 : vector<4x32x1xf32> to vector<128x1xf32>
    %c0_8 = arith.constant 0 : index
    %c0_9 = arith.constant 0 : index
    %9 = vector.load %arg5[%c0_8, %c0_9] : memref<1x32xf32, #tpu.memory_space<vmem>>, vector<1x32xf32>
    %10 = vector.broadcast %8 : vector<128x1xf32> to vector<128x32xf32>
    %11 = vector.broadcast %9 : vector<1x32xf32> to vector<128x32xf32>
    %12 = arith.mulf %10, %11 : vector<128x32xf32>
    %13 = arith.addf %6, %12 : vector<128x32xf32>
    %c0_10 = arith.constant 0 : index
    %c0_11 = arith.constant 0 : index
    %14 = vector.load %arg7[%c0_10, %c0_11] : memref<4x32xf32, #tpu.memory_space<vmem>>, vector<4x32xf32>
    %cst_12 = arith.constant 0.000000e+00 : f32
    %15 = vector.broadcast %cst_12 : f32 to vector<128x32xf32>
    %16 = arith.maximumf %13, %15 : vector<128x32xf32>
    %17 = vector.shape_cast %16 : vector<128x32xf32> to vector<4x32x32xf32>
    %cst_13 = arith.constant dense<0.000000e+00> : vector<4x32xf32>
    %18 = vector.multi_reduction <add>, %17, %cst_13 [1] : vector<4x32x32xf32> to vector<4x32xf32>
    %19 = arith.addf %14, %18 : vector<4x32xf32>
    %c0_14 = arith.constant 0 : index
    %c0_15 = arith.constant 0 : index
    %20 = vector.load %arg7[%c0_14, %c0_15] : memref<4x32xf32, #tpu.memory_space<vmem>>, vector<4x32xf32>
    tpu.vector_store %arg7[%c0_14, %c0_15], %19 {strides = array<i32>} : memref<4x32xf32, #tpu.memory_space<vmem>>, vector<4x32xf32>,
    %c0_i32_16 = arith.constant 0 : i32
    %21 = arith.cmpi eq, %arg1, %c0_i32_16 : i32
    %22 = arith.extui %21 : i1 to i32
    %c0_i32_17 = arith.constant 0 : i32
    %23 = arith.cmpi ne, %22, %c0_i32_17 : i32
    scf.if %23 {
      %c0_18 = arith.constant 0 : index
      %c0_19 = arith.constant 0 : index
      %24 = vector.load %arg7[%c0_18, %c0_19] : memref<4x32xf32, #tpu.memory_space<vmem>>, vector<4x32xf32>
      %c0_20 = arith.constant 0 : index
      %c0_21 = arith.constant 0 : index
      %c0_22 = arith.constant 0 : index
      %25 = vector.load %arg6[%c0_20, %c0_21, %c0_22] : memref<1x4x32xf32, #tpu.memory_space<vmem>>, vector<1x4x32xf32>
      %26 = vector.shape_cast %25 : vector<1x4x32xf32> to vector<4x32xf32>
      %27 = vector.shape_cast %24 : vector<4x32xf32> to vector<1x4x32xf32>
      tpu.vector_store %arg6[%c0_20, %c0_21, %c0_22], %27 {strides = array<i32>} : memref<1x4x32xf32, #tpu.memory_space<vmem>>, vector<1x4x32xf32>,
    } else {
    }
    return
  }
  func.func @transform_0(%arg0: i32, %arg1: i32) -> (i32, i32, i32) {
    %c1_i32 = arith.constant 1 : i32
    %0 = arith.muli %arg0, %c1_i32 : i32
    %1 = arith.addi %0, %arg1 : i32
    %c0_i32 = arith.constant 0 : i32
    %c0_i32_0 = arith.constant 0 : i32
    %c0_i32_1 = arith.constant 0 : i32
    return %c0_i32, %1, %c0_i32_0 : i32, i32, i32
  }
  func.func @transform_1(%arg0: i32, %arg1: i32) -> (i32, i32, i32) {
    %c1_i32 = arith.constant 1 : i32
    %0 = arith.muli %arg0, %c1_i32 : i32
    %1 = arith.addi %0, %arg1 : i32
    %c0_i32 = arith.constant 0 : i32
    %c0_i32_0 = arith.constant 0 : i32
    %c0_i32_1 = arith.constant 0 : i32
    return %c0_i32, %1, %c0_i32_0 : i32, i32, i32
  }
  func.func @transform_2(%arg0: i32, %arg1: i32) -> (i32, i32) {
    %c0_i32 = arith.constant 0 : i32
    %c0_i32_0 = arith.constant 0 : i32
    %c0_i32_1 = arith.constant 0 : i32
    return %c0_i32, %c0_i32_0 : i32, i32
  }
  func.func @transform_3(%arg0: i32, %arg1: i32) -> (i32, i32) {
    %c0_i32 = arith.constant 0 : i32
    %c0_i32_0 = arith.constant 0 : i32
    %c0_i32_1 = arith.constant 0 : i32
    return %c0_i32, %c0_i32_0 : i32, i32
  }
  func.func @transform_4(%arg0: i32, %arg1: i32) -> (i32, i32, i32) {
    %c0_i32 = arith.constant 0 : i32
    %c0_i32_0 = arith.constant 0 : i32
    %c0_i32_1 = arith.constant 0 : i32
    return %arg0, %c0_i32, %c0_i32_0 : i32, i32, i32
  }
}

</mosaic_0001>

<llo_original>
// kernel: tpu_custom_call.1
$region0: #{tpu_custom_call.1}
  #allocation0 [shape = 'u32[]', space=smem, size = 0x4, offset = 0x4, fixed_abs, tag = 'smem constant byte address 0x4 - core index']
  #allocation1 [shape = 'u32[144,128]{1,0:T(1,128)}', space=vmem, size = 0x12000, scoped, tag = 'internal scratch']
  #allocation2 [shape = 'f32[4,32]{1,0:T(4,128)}', space=vmem, size = 0x800, scoped, tag = 'scratch operand']
  %s0 = inlined_call_operand.vmem [shape: f32[4,32,32], index: 0, kind: input, shape index: {}]
  %s1 = inlined_call_operand.vmem [shape: f32[4,32,1], index: 1, kind: input, shape index: {}]
  %s2 = inlined_call_operand.hbm [shape: f32[32,32], index: 2, kind: input, shape index: {}]
  %s3 = inlined_call_operand.vmem [shape: f32[1,32], index: 3, kind: input, shape index: {}]
  %s4 = inlined_call_operand.hbm [shape: f32[1,4,32], index: 4, kind: output, shape index: {}]
  %s5 = sld [smem:[#allocation0]]
  $region38: #{tpu_custom_call.1} parent=0
    _
  %s7 = ssub.s32 1, %s5
  %s8 = scalar_select 0, %s7, %s5
  $region1: #{tpu_custom_call.1} parent=0
    #allocation3 [shape = 'u8[16384]{0}', space=vmem, size = 0x4000, scoped, tag = 'input window, operand 2, single buffered']
    #allocation4 [shape = 's32[1]{0}', space=sflag, size = 0x4, scoped, tag = 'scoped memory for tpu_custom_call.1']
    #allocation5 [shape = 's32[1]{0}', space=sflag, size = 0x4, scoped, tag = 'scoped memory for tpu_custom_call.1']
    #allocation6 [shape = 'u8[2048]{0}', space=vmem, size = 0x800, scoped, tag = 'output window, operand 0, single buffered']
    %9 = vsyncpa [#allocation4], 0
    %10 = vsyncpa [#allocation5], 0
    // Predicated region
    $region2: #{tpu_custom_call.1} parent=1 // pred_check
      _
    $region3: #{tpu_custom_call.1} parent=1 // pred_check_branch
      %12 = sbr.rel (0) target = $region5
    $region4: #{tpu_custom_call.1} parent=1 // pred_region
      %s13 = sadd.s32 0, 0
      %s14 = smul.u32 4, %s13
      %p15 = scmp.lt.s32.totalorder %s14, 3
      %s16 = scalar_select %p15, %s14, 3
      %s17 = smul.addr %s16, 8
      %s18 = scalar_lea.vmem %s0, %s17
      %s19 = sadd.s32 0, 0
      %s20 = smul.u32 4, %s19
    $region5: #{tpu_custom_call.1} parent=1 // pred_fallthru
      _
    // Predicated region
    $region6: #{tpu_custom_call.1} parent=1 // pred_check
      _
    $region7: #{tpu_custom_call.1} parent=1 // pred_check_branch
      %22 = sbr.rel (0) target = $region9
    $region8: #{tpu_custom_call.1} parent=1 // pred_region
      %s23 = sadd.s32 0, 0
      %s24 = smul.u32 4, %s23
      %p25 = scmp.lt.s32.totalorder %s24, 3
      %s26 = scalar_select %p25, %s24, 3
      %s27 = smul.addr %s26, 8
      %s28 = scalar_lea.vmem %s1, %s27
      %s29 = sadd.s32 0, 0
      %s30 = smul.u32 4, %s29
    $region9: #{tpu_custom_call.1} parent=1 // pred_fallthru
      _
    // Predicated region
    $region10: #{tpu_custom_call.1} parent=1 // pred_check
      _
    $region11: #{tpu_custom_call.1} parent=1 // pred_check_branch
      %32 = sbr.rel (0) target = $region13
    $region12: #{tpu_custom_call.1} parent=1 // pred_region
      %s34 = ssub.s32 512, 512
      %35 = vsyncadd [#allocation4], %s34
      %s36 = sshll.u32 [#allocation3], 4
      %s37 = int_to_ptr.vmem [resolvable:$true] %s36
      %42 = dma.hbm_to_vmem [thread:$0]  %s2, 512, %s37, [#allocation4], 128, 128, 8
    $region13: #{tpu_custom_call.1} parent=1 // pred_fallthru
      _
    // Predicated region
    $region14: #{tpu_custom_call.1} parent=1 // pred_check
      _
    $region15: #{tpu_custom_call.1} parent=1 // pred_check_branch
      %44 = sbr.rel (0) target = $region17
    $region16: #{tpu_custom_call.1} parent=1 // pred_region
      _
    $region17: #{tpu_custom_call.1} parent=1 // pred_fallthru
      _
    // Predicated region
    $region18: #{tpu_custom_call.1} parent=1 // pred_check
      _
    $region19: #{tpu_custom_call.1} parent=1 // pred_check_branch
      %46 = sbr.rel (0) target = $region21
    $region20: #{tpu_custom_call.1} parent=1 // pred_region
      %47 = dma.done [#allocation4], 512
    $region21: #{tpu_custom_call.1} parent=1 // pred_fallthru
      _
    %s48 = sadd.s32 0, 0
    %s49 = smul.u32 4, %s48
    %p50 = scmp.lt.s32.totalorder %s49, 3
    %s51 = scalar_select %p50, %s49, 3
    %s52 = smul.addr %s51, 8
    %s53 = scalar_lea.vmem %s0, %s52
    %s54 = sadd.s32 0, 0
    %s55 = smul.u32 4, %s54
    %p56 = scmp.lt.s32.totalorder %s55, 3
    %s57 = scalar_select %p56, %s55, 3
    %s58 = smul.addr %s57, 8
    %s59 = scalar_lea.vmem %s1, %s58
    %s60 = sadd.s32 0, 0
    %s61 = smul.u32 4, %s60
    %p62 = scmp.lt.s32.totalorder %s61, 3
    %s63 = scalar_select %p62, %s61, 3
    %s64 = smul.addr %s63, 8
    %s65 = scalar_lea.vmem %s0, %s64
    %s66 = sadd.s32 0, 0
    %s67 = smul.u32 4, %s66
    %s68 = sadd.s32 0, 0
    %s69 = smul.u32 4, %s68
    %p70 = scmp.lt.s32.totalorder %s69, 3
    %s71 = scalar_select %p70, %s69, 3
    %s72 = smul.addr %s71, 8
    %s73 = scalar_lea.vmem %s1, %s72
    %s74 = sadd.s32 0, 0
    %s75 = smul.u32 4, %s74
    %p76 = scmp.eq.s32.totalorder 0, 0
    // Predicated region
    $region22: #{tpu_custom_call.1} parent=1 // pred_check
      %p77 = pneg %p76
    $region23: #{tpu_custom_call.1} parent=1 // pred_check_branch
      %79 = sbr.rel (%p77) target = $region25
    $region24: #{tpu_custom_call.1} parent=1 // pred_region
      %vm80 = vcmask 257024
      %81 = vst.msk [vmem:[#allocation2] sm:$0xf] %vm80, 0.0
    $region25: #{tpu_custom_call.1} parent=1 // pred_fallthru
      _
    %v82 = vld [vmem:[%s65] sm:$0xff]
    %v83 = vld [vmem:[%s65 + $0x8] sm:$0xff]
    %v84 = vld [vmem:[%s65 + $0x10] sm:$0xff]
    %v85 = vld [vmem:[%s65 + $0x18] sm:$0xff]
    %v86 = vld [vmem:[%s65 + $0x20] sm:$0xff]
    %v87 = vld [vmem:[%s65 + $0x28] sm:$0xff]
    %v88 = vld [vmem:[%s65 + $0x30] sm:$0xff]
    %v89 = vld [vmem:[%s65 + $0x38] sm:$0xff]
    %v90 = vld [vmem:[%s65 + $0x40] sm:$0xff]
    %v91 = vld [vmem:[%s65 + $0x48] sm:$0xff]
    %v92 = vld [vmem:[%s65 + $0x50] sm:$0xff]
    %v93 = vld [vmem:[%s65 + $0x58] sm:$0xff]
    %v94 = vld [vmem:[%s65 + $0x60] sm:$0xff]
    %v95 = vld [vmem:[%s65 + $0x68] sm:$0xff]
    %v96 = vld [vmem:[%s65 + $0x70] sm:$0xff]
    %v97 = vld [vmem:[%s65 + $0x78] sm:$0xff]
    %v98 = vld [vmem:[#allocation3] sm:$0xff]
    %v99 = vld [vmem:[#allocation3 + $0x8] sm:$0xff]
    %v100 = vld [vmem:[#allocation3 + $0x10] sm:$0xff]
    %v101 = vld [vmem:[#allocation3 + $0x18] sm:$0xff]
    %v102 = vld [vmem:[%s73] sm:$0xff]
    %v103 = vld [vmem:[%s73 + $0x8] sm:$0xff]
    %v104 = vld [vmem:[%s73 + $0x10] sm:$0xff]
    %v105 = vld [vmem:[%s73 + $0x18] sm:$0xff]
    %v106 = vld [vmem:[%s73 + $0x20] sm:$0xff]
    %v107 = vld [vmem:[%s73 + $0x28] sm:$0xff]
    %v108 = vld [vmem:[%s73 + $0x30] sm:$0xff]
    %v109 = vld [vmem:[%s73 + $0x38] sm:$0xff]
    %v110 = vld [vmem:[%s73 + $0x40] sm:$0xff]
    %v111 = vld [vmem:[%s73 + $0x48] sm:$0xff]
    %v112 = vld [vmem:[%s73 + $0x50] sm:$0xff]
    %v113 = vld [vmem:[%s73 + $0x58] sm:$0xff]
    %v114 = vld [vmem:[%s73 + $0x60] sm:$0xff]
    %v115 = vld [vmem:[%s73 + $0x68] sm:$0xff]
    %v116 = vld [vmem:[%s73 + $0x70] sm:$0xff]
    %v117 = vld [vmem:[%s73 + $0x78] sm:$0xff]
    %v118 = vld [vmem:[%s3] sm:$0x1]
    %120 = vset.pattern.permute.xlu0 0
    %121 = vperm.xlu0 %120, %v102
    %v122 = vpop.permute.xlu0 %121
    %125 = vset.pattern.permute.xlu0 0
    %126 = vperm.xlu0 %125, %v103
    %v127 = vpop.permute.xlu0 %126
    %130 = vset.pattern.permute.xlu0 0
    %131 = vperm.xlu0 %130, %v104
    %v132 = vpop.permute.xlu0 %131
    %135 = vset.pattern.permute.xlu0 0
    %136 = vperm.xlu0 %135, %v105
    %v137 = vpop.permute.xlu0 %136
    %140 = vset.pattern.permute.xlu0 0
    %141 = vperm.xlu0 %140, %v106
    %v142 = vpop.permute.xlu0 %141
    %145 = vset.pattern.permute.xlu0 0
    %146 = vperm.xlu0 %145, %v107
    %v147 = vpop.permute.xlu0 %146
    %150 = vset.pattern.permute.xlu0 0
    %151 = vperm.xlu0 %150, %v108
    %v152 = vpop.permute.xlu0 %151
    %155 = vset.pattern.permute.xlu0 0
    %156 = vperm.xlu0 %155, %v109
    %v157 = vpop.permute.xlu0 %156
    %160 = vset.pattern.permute.xlu0 0
    %161 = vperm.xlu0 %160, %v110
    %v162 = vpop.permute.xlu0 %161
    %165 = vset.pattern.permute.xlu0 0
    %166 = vperm.xlu0 %165, %v111
    %v167 = vpop.permute.xlu0 %166
    %170 = vset.pattern.permute.xlu0 0
    %171 = vperm.xlu0 %170, %v112
    %v172 = vpop.permute.xlu0 %171
    %175 = vset.pattern.permute.xlu0 0
    %176 = vperm.xlu0 %175, %v113
    %v177 = vpop.permute.xlu0 %176
    %180 = vset.pattern.permute.xlu0 0
    %181 = vperm.xlu0 %180, %v114
    %v182 = vpop.permute.xlu0 %181
    %185 = vset.pattern.permute.xlu0 0
    %186 = vperm.xlu0 %185, %v115
    %v187 = vpop.permute.xlu0 %186
    %190 = vset.pattern.permute.xlu0 0
    %191 = vperm.xlu0 %190, %v116
    %v192 = vpop.permute.xlu0 %191
    %195 = vset.pattern.permute.xlu0 0
    %196 = vperm.xlu0 %195, %v117
    %v197 = vpop.permute.xlu0 %196
    %v200 = vlaneseq
    %v201 = vshrl.u32 %v200, 7
    %v202 = vsub.s32 0, %v201
    %v203 = vrot.slane %v118, %v202
    %v205 = vmul.f32 %v122, %v203
    %v206 = vmul.f32 %v127, %v203
    %v207 = vmul.f32 %v132, %v203
    %v208 = vmul.f32 %v137, %v203
    %v209 = vmul.f32 %v142, %v203
    %v210 = vmul.f32 %v147, %v203
    %v211 = vmul.f32 %v152, %v203
    %v212 = vmul.f32 %v157, %v203
    %v213 = vmul.f32 %v162, %v203
    %v214 = vmul.f32 %v167, %v203
    %v215 = vmul.f32 %v172, %v203
    %v216 = vmul.f32 %v177, %v203
    %v217 = vmul.f32 %v182, %v203
    %v218 = vmul.f32 %v187, %v203
    %v219 = vmul.f32 %v192, %v203
    %v220 = vmul.f32 %v197, %v203
    %vm221 = vcmask 261120
    %v223 = vsel %vm221, %v82, 0
    %v226 = vsel %vm221, %v83, 0
    %v229 = vsel %vm221, %v84, 0
    %v232 = vsel %vm221, %v85, 0
    %v235 = vsel %vm221, %v86, 0
    %v238 = vsel %vm221, %v87, 0
    %v241 = vsel %vm221, %v88, 0
    %v244 = vsel %vm221, %v89, 0
    %v247 = vsel %vm221, %v90, 0
    %v250 = vsel %vm221, %v91, 0
    %v253 = vsel %vm221, %v92, 0
    %v256 = vsel %vm221, %v93, 0
    %v259 = vsel %vm221, %v94, 0
    %v262 = vsel %vm221, %v95, 0
    %v265 = vsel %vm221, %v96, 0
    %v268 = vsel %vm221, %v97, 0
    %270 = vmatprep.subr.mxu0 0.0
    %271 = vmatpush1.msra.mxu0 %v98
    %272 = vmatprep.subr.mxu0 0.0
    %273 = vmatpush1.msra.mxu0 %v99
    %274 = vmatprep.subr.mxu0 0.0
    %275 = vmatpush1.msra.mxu0 %v100
    %276 = vmatprep.subr.mxu0 0.0
    %277 = vmatpush1.msra.mxu0 %v101
    %278 = vmatprep.subr.mxu0 0.0
    %279 = vmatpush1.msra.mxu0 0.0
    %280 = vmatprep.subr.mxu0 0.0
    %281 = vmatpush1.msra.mxu0 0.0
    %282 = vmatprep.subr.mxu0 0.0
    %283 = vmatpush1.msra.mxu0 0.0
    %284 = vmatprep.subr.mxu0 0.0
    %285 = vmatpush1.msra.mxu0 0.0
    %286 = vmatprep.subr.mxu0 0.0
    %287 = vmatpush1.msra.mxu0 0.0
    %288 = vmatprep.subr.mxu0 0.0
    %289 = vmatpush1.msra.mxu0 0.0
    %290 = vmatprep.subr.mxu0 0.0
    %291 = vmatpush1.msra.mxu0 0.0
    %292 = vmatprep.subr.mxu0 0.0
    %293 = vmatpush1.msra.mxu0 0.0
    %294 = vmatprep.subr.mxu0 0.0
    %295 = vmatpush1.msra.mxu0 0.0
    %296 = vmatprep.subr.mxu0 0.0
    %297 = vmatpush1.msra.mxu0 0.0
    %298 = vmatprep.subr.mxu0 0.0
    %299 = vmatpush1.msra.mxu0 0.0
    %300 = vmatprep.subr.mxu0 0.0
    %301 = vmatpush1.msra.mxu0 0.0
    %302 = vmatprep.subr.mxu0 0.0
    %303 = vmatpush1.msra.mxu0 0.0
    %304 = vmatprep.subr.mxu0 0.0
    %305 = vmatpush1.msra.mxu0 0.0
    %306 = vmatprep.subr.mxu0 0.0
    %307 = vmatpush1.msra.mxu0 0.0
    %308 = vmatprep.subr.mxu0 0.0
    %309 = vmatpush1.msra.mxu0 0.0
    %310 = vmatprep.subr.mxu0 0.0
    %311 = vmatpush1.msra.mxu0 0.0
    %312 = vmatprep.subr.mxu0 0.0
    %313 = vmatpush1.msra.mxu0 0.0
    %314 = vmatprep.subr.mxu0 0.0
    %315 = vmatpush1.msra.mxu0 0.0
    %316 = vmatprep.subr.mxu0 0.0
    %317 = vmatpush1.msra.mxu0 0.0
    %318 = vmatprep.subr.mxu0 0.0
    %319 = vmatpush1.msra.mxu0 0.0
    %320 = vmatprep.subr.mxu0 0.0
    %321 = vmatpush1.msra.mxu0 0.0
    %322 = vmatprep.subr.mxu0 0.0
    %323 = vmatpush1.msra.mxu0 0.0
    %324 = vmatprep.subr.mxu0 0.0
    %325 = vmatpush1.msra.mxu0 0.0
    %326 = vmatprep.subr.mxu0 0.0
    %327 = vmatpush1.msra.mxu0 0.0
    %328 = vmatprep.subr.mxu0 0.0
    %329 = vmatpush1.msra.mxu0 0.0
    %330 = vmatprep.subr.mxu0 0.0
    %331 = vmatpush1.msra.mxu0 0.0
    %332 = vmatprep.subr.mxu0 0.0
    %333 = vmatpush1.msra.mxu0 0.0
    %334 = vmatprep.mubr.f32.mxu0 0.0
    %335 = vmatmul.mubr.f32.gmra.mrb[0].mxu0 %v223
    %v336 = vpop.f32.mrb[0].mxu0
    %v337 = vadd.f32 %v205, %v336
    %v338 = vpop.f32.mrb[0].mxu0
    %339 = vmatprep.mubr.f32.mxu0 0.0
    %340 = vmatmul.mubr.f32.gmra.mrb[0].mxu0 %v226
    %v341 = vpop.f32.mrb[0].mxu0
    %v342 = vadd.f32 %v206, %v341
    %v343 = vpop.f32.mrb[0].mxu0
    %344 = vmatprep.mubr.f32.mxu0 0.0
    %345 = vmatmul.mubr.f32.gmra.mrb[0].mxu0 %v229
    %v346 = vpop.f32.mrb[0].mxu0
    %v347 = vadd.f32 %v207, %v346
    %v348 = vpop.f32.mrb[0].mxu0
    %349 = vmatprep.mubr.f32.mxu0 0.0
    %350 = vmatmul.mubr.f32.gmra.mrb[0].mxu0 %v232
    %v351 = vpop.f32.mrb[0].mxu0
    %v352 = vadd.f32 %v208, %v351
    %v353 = vpop.f32.mrb[0].mxu0
    %354 = vmatprep.mubr.f32.mxu0 0.0
    %355 = vmatmul.mubr.f32.gmra.mrb[0].mxu0 %v235
    %v356 = vpop.f32.mrb[0].mxu0
    %v357 = vadd.f32 %v209, %v356
    %v358 = vpop.f32.mrb[0].mxu0
    %359 = vmatprep.mubr.f32.mxu0 0.0
    %360 = vmatmul.mubr.f32.gmra.mrb[0].mxu0 %v238
    %v361 = vpop.f32.mrb[0].mxu0
    %v362 = vadd.f32 %v210, %v361
    %v363 = vpop.f32.mrb[0].mxu0
    %364 = vmatprep.mubr.f32.mxu0 0.0
    %365 = vmatmul.mubr.f32.gmra.mrb[0].mxu0 %v241
    %v366 = vpop.f32.mrb[0].mxu0
    %v367 = vadd.f32 %v211, %v366
    %v368 = vpop.f32.mrb[0].mxu0
    %369 = vmatprep.mubr.f32.mxu0 0.0
    %370 = vmatmul.mubr.f32.gmra.mrb[0].mxu0 %v244
    %v371 = vpop.f32.mrb[0].mxu0
    %v372 = vadd.f32 %v212, %v371
    %v373 = vpop.f32.mrb[0].mxu0
    %374 = vmatprep.mubr.f32.mxu0 0.0
    %375 = vmatmul.mubr.f32.gmra.mrb[0].mxu0 %v247
    %v376 = vpop.f32.mrb[0].mxu0
    %v377 = vadd.f32 %v213, %v376
    %v378 = vpop.f32.mrb[0].mxu0
    %379 = vmatprep.mubr.f32.mxu0 0.0
    %380 = vmatmul.mubr.f32.gmra.mrb[0].mxu0 %v250
    %v381 = vpop.f32.mrb[0].mxu0
    %v382 = vadd.f32 %v214, %v381
    %v383 = vpop.f32.mrb[0].mxu0
    %384 = vmatprep.mubr.f32.mxu0 0.0
    %385 = vmatmul.mubr.f32.gmra.mrb[0].mxu0 %v253
    %v386 = vpop.f32.mrb[0].mxu0
    %v387 = vadd.f32 %v215, %v386
    %v388 = vpop.f32.mrb[0].mxu0
    %389 = vmatprep.mubr.f32.mxu0 0.0
    %390 = vmatmul.mubr.f32.gmra.mrb[0].mxu0 %v256
    %v391 = vpop.f32.mrb[0].mxu0
    %v392 = vadd.f32 %v216, %v391
    %v393 = vpop.f32.mrb[0].mxu0
    %394 = vmatprep.mubr.f32.mxu0 0.0
    %395 = vmatmul.mubr.f32.gmra.mrb[0].mxu0 %v259
    %v396 = vpop.f32.mrb[0].mxu0
    %v397 = vadd.f32 %v217, %v396
    %v398 = vpop.f32.mrb[0].mxu0
    %399 = vmatprep.mubr.f32.mxu0 0.0
    %400 = vmatmul.mubr.f32.gmra.mrb[0].mxu0 %v262
    %v401 = vpop.f32.mrb[0].mxu0
    %v402 = vadd.f32 %v218, %v401
    %v403 = vpop.f32.mrb[0].mxu0
    %404 = vmatprep.mubr.f32.mxu0 0.0
    %405 = vmatmul.mubr.f32.gmra.mrb[0].mxu0 %v265
    %v406 = vpop.f32.mrb[0].mxu0
    %v407 = vadd.f32 %v219, %v406
    %v408 = vpop.f32.mrb[0].mxu0
    %409 = vmatprep.mubr.f32.mxu0 0.0
    %410 = vmatmul.mubr.f32.gmra.mrb[0].mxu0 %v268
    %v411 = vpop.f32.mrb[0].mxu0
    %v412 = vadd.f32 %v220, %v411
    %v413 = vpop.f32.mrb[0].mxu0
    %414 = vdwg.mxu0
    %v415 = vld [vmem:[#allocation2] sm:$0xf]
    %v416 = vmax.f32 %v337, 0.0
    %v417 = vmax.f32 %v342, 0.0
    %v418 = vmax.f32 %v347, 0.0
    %v419 = vmax.f32 %v352, 0.0
    %v420 = vmax.f32 %v357, 0.0
    %v421 = vmax.f32 %v362, 0.0
    %v422 = vmax.f32 %v367, 0.0
    %v423 = vmax.f32 %v372, 0.0
    %v424 = vmax.f32 %v377, 0.0
    %v425 = vmax.f32 %v382, 0.0
    %v426 = vmax.f32 %v387, 0.0
    %v427 = vmax.f32 %v392, 0.0
    %v428 = vmax.f32 %v397, 0.0
    %v429 = vmax.f32 %v402, 0.0
    %v430 = vmax.f32 %v407, 0.0
    %v431 = vmax.f32 %v412, 0.0
    %v432 = vsel %vm221, %v416, 0.0
    %v433 = vsel %vm221, %v417, 0.0
    %v434 = vadd.f32 %v432, %v433
    %v435 = vsel %vm221, %v418, 0.0
    %v436 = vadd.f32 %v434, %v435
    %v437 = vsel %vm221, %v419, 0.0
    %v438 = vadd.f32 %v436, %v437
    %v439 = vrot.slane %v438, 4
    %v440 = vadd.f32 %v438, %v439
    %v441 = vrot.slane %v440, 2
    %v442 = vadd.f32 %v440, %v441
    %v443 = vrot.slane %v442, 1
    %v444 = vadd.f32 %v442, %v443
    %v445 = vsel %vm221, %v420, 0.0
    %v446 = vsel %vm221, %v421, 0.0
    %v447 = vadd.f32 %v445, %v446
    %v448 = vsel %vm221, %v422, 0.0
    %v449 = vadd.f32 %v447, %v448
    %v450 = vsel %vm221, %v423, 0.0
    %v451 = vadd.f32 %v449, %v450
    %v452 = vrot.slane %v451, 4
    %v453 = vadd.f32 %v451, %v452
    %v454 = vrot.slane %v453, 2
    %v455 = vadd.f32 %v453, %v454
    %v456 = vrot.slane %v455, 1
    %v457 = vadd.f32 %v455, %v456
    %v458 = vsel %vm221, %v424, 0.0
    %v459 = vsel %vm221, %v425, 0.0
    %v460 = vadd.f32 %v458, %v459
    %v461 = vsel %vm221, %v426, 0.0
    %v462 = vadd.f32 %v460, %v461
    %v463 = vsel %vm221, %v427, 0.0
    %v464 = vadd.f32 %v462, %v463
    %v465 = vrot.slane %v464, 4
    %v466 = vadd.f32 %v464, %v465
    %v467 = vrot.slane %v466, 2
    %v468 = vadd.f32 %v466, %v467
    %v469 = vrot.slane %v468, 1
    %v470 = vadd.f32 %v468, %v469
    %v471 = vsel %vm221, %v428, 0.0
    %v472 = vsel %vm221, %v429, 0.0
    %v473 = vadd.f32 %v471, %v472
    %v474 = vsel %vm221, %v430, 0.0
    %v475 = vadd.f32 %v473, %v474
    %v476 = vsel %vm221, %v431, 0.0
    %v477 = vadd.f32 %v475, %v476
    %v478 = vrot.slane %v477, 4
    %v479 = vadd.f32 %v477, %v478
    %v480 = vrot.slane %v479, 2
    %v481 = vadd.f32 %v479, %v480
    %v482 = vrot.slane %v481, 1
    %v483 = vadd.f32 %v481, %v482
    %vm488 = vcmask 1041409
    %v489 = vsel %vm488, %v457, %v444
    %vm490 = vcmask 1042434
    %v491 = vsel %vm490, %v470, %v489
    %vm492 = vcmask 1043459
    %v493 = vsel %vm492, %v483, %v491
    %v495 = vadd.f32 %v415, %v493
    %vm496 = vcmask 257024
    %497 = vst.msk [vmem:[#allocation2] sm:$0xf] %vm496, %v495
    // Predicated region
    $region26: #{tpu_custom_call.1} parent=1 // pred_check
      %p498 = pneg %p76
    $region27: #{tpu_custom_call.1} parent=1 // pred_check_branch
      %500 = sbr.rel (%p498) target = $region29
    $region28: #{tpu_custom_call.1} parent=1 // pred_region
      %v501 = vld [vmem:[#allocation2] sm:$0xf]
      %502 = vst.msk [vmem:[#allocation6] sm:$0xf] %vm496, %v501
    $region29: #{tpu_custom_call.1} parent=1 // pred_fallthru
      _
    // Predicated region
    $region30: #{tpu_custom_call.1} parent=1 // pred_check
      _
    $region31: #{tpu_custom_call.1} parent=1 // pred_check_branch
      %504 = sbr.rel (0) target = $region33
    $region32: #{tpu_custom_call.1} parent=1 // pred_region
      %s506 = ssub.s32 64, 64
      %507 = vsyncadd [#allocation5], %s506
      %s509 = sshll.u32 [#allocation6], 4
      %s510 = int_to_ptr.vmem [resolvable:$true] %s509
      %512 = dma.vmem_to_hbm [thread:$0]  %s510, 64, %s4, [#allocation5]
    $region33: #{tpu_custom_call.1} parent=1 // pred_fallthru
      _
    // Predicated region
    $region34: #{tpu_custom_call.1} parent=1 // pred_check
      _
    $region35: #{tpu_custom_call.1} parent=1 // pred_check_branch
      %514 = sbr.rel (0) target = $region37
    $region36: #{tpu_custom_call.1} parent=1 // pred_region
      %515 = dma.done [#allocation5], 64
    $region37: #{tpu_custom_call.1} parent=1 // pred_fallthru
      _
    %516 = vsyncpa [#allocation4], 1
    %517 = vsyncpa [#allocation5], 1

</llo_original>
